<compile_context>
chip_gen: v6e
topology: v6e:2x2x1
jax: 0.10.0
libtpu: 0.0.40
codegen_flags: <defaults>
</compile_context>

<pallas_src>
import math

import jax
import jax.numpy as jnp
from jax.experimental import pallas as pl
from jax.experimental.pallas import tpu as pltpu

_LANE = 128       # TPU lane width
_TN_CAP = 2048    # target lane-dim tile size (multiple of 128)


def _round_up(n: int, m: int) -> int:
    return ((n + m - 1) // m) * m


def _drop_path_kernel(scale_ref, x_ref, o_ref):
    """Pure broadcast-multiply hot path.

    scale_ref : (Bt, 1) float32 VMEM  -- per-sample scale (0 or 1/keep_prob)
    x_ref     : (Bt, Tn) VMEM tile of the flattened input
    o_ref     : (Bt, Tn) VMEM tile of the output
    """
    o_ref[...] = (x_ref[...].astype(jnp.float32) * scale_ref[...]).astype(o_ref.dtype)


def drop_path(x, drop_prob: float = 0.0, training: bool = False, *, seed: int = 0):
    """Pallas DropPath forward. x: (B, ...) -- mask is per leading (batch) dim."""
    if drop_prob == 0.0 or not training:
        return x

    keep_prob = 1.0 - drop_prob
    orig_shape = x.shape
    B = orig_shape[0]
    M = int(math.prod(orig_shape[1:]))

    # Per-sample keep decision (only B scalars; computed in the wrapper).
    # NOTE: the caller must vary `seed` across calls/layers for independent masks.
    key = jax.random.PRNGKey(seed)
    u = jax.random.uniform(key, (B,), dtype=jnp.float32)
    scale = jnp.where(
        u >= jnp.float32(drop_prob),
        jnp.float32(1.0 / keep_prob),
        jnp.float32(0.0),
    ).reshape(B, 1)

    # Lane-dense flattening: (B, C, H, W, ...) -> (B, M), padded to a tile multiple.
    tn = min(_round_up(M, _LANE), _TN_CAP)
    Mp = _round_up(M, tn)
    x2 = x.reshape(B, M)
    if Mp != M:
        x2 = jnp.pad(x2, ((0, 0), (0, Mp - M)))

    # Second-to-last block dim must be a multiple of 8 or the full extent.
    bt = 8 if (B % 8 == 0) else B
    grid = (B // bt, Mp // tn)

    itemsize = jnp.dtype(x.dtype).itemsize
    cost = pl.CostEstimate(
        flops=B * Mp,
        transcendentals=0,
        bytes_accessed=2 * B * Mp * itemsize + B * 4,
    )

    out2 = pl.pallas_call(
        _drop_path_kernel,
        out_shape=jax.ShapeDtypeStruct((B, Mp), x.dtype),
        grid_spec=pltpu.PrefetchScalarGridSpec(
            num_scalar_prefetch=0,
            grid=grid,
            in_specs=[
                pl.BlockSpec((bt, 1), lambda i, j: (i, 0)),   # per-sample scale
                pl.BlockSpec((bt, tn), lambda i, j: (i, j)),  # flattened input tile
            ],
            out_specs=pl.BlockSpec((bt, tn), lambda i, j: (i, j)),
        ),
        compiler_params=pltpu.CompilerParams(
            dimension_semantics=("parallel", "parallel"),
        ),
        cost_estimate=cost,
    )(scale, x2)

    if Mp != M:
        out2 = out2[:, :M]
    return out2.reshape(orig_shape)


class DropPath:
    """Mirror of the PyTorch module (no parameters)."""

    def __init__(self, drop_prob=None):
        self.drop_prob = drop_prob
        self.training = True

    def __call__(self, x, *, seed: int = 0):
        return drop_path(x, self.drop_prob or 0.0, self.training, seed=seed)


if __name__ == "__main__":
    key = jax.random.PRNGKey(0)
    B, C, H, W = 2, 4, 16, 16
    x = jax.random.normal(key, (B, C, H, W), dtype=jnp.float32)

    drop_prob = 0.5
    keep_prob = 1.0 - drop_prob
    seed = 1234

    mod = DropPath(drop_prob=drop_prob)
    mod.training = True
    y = jax.block_until_ready(mod(x, seed=seed))

    # Exact reference using the same per-sample draw.
    u_ref = jax.random.uniform(jax.random.PRNGKey(seed), (B,), dtype=jnp.float32)
    scale_ref = jnp.where(u_ref >= drop_prob, 1.0 / keep_prob, 0.0)
    ref = x * scale_ref.reshape(B, 1, 1, 1)
    assert bool(jnp.allclose(y, ref, atol=1e-6)), "mismatch vs per-sample reference"

    # Sanity: each sample is either all-zero or x / keep_prob.
    y_np = jax.device_get(y)
    x_np = jax.device_get(x)
    for b in range(B):
        is_zero = bool((abs(y_np[b]) < 1e-7).all())
        is_scaled = bool((abs(y_np[b] - x_np[b] / keep_prob) < 1e-5).all())
        assert is_zero or is_scaled, "per-sample mask semantics violated"

    # Eval / drop_prob=0 path is identity.
    mod.training = False
    y_eval = jax.block_until_ready(mod(x))
    assert bool((y_eval == x).all())

    # Non-multiple-of-128 spatial size exercises the padding path.
    x_odd = jax.random.normal(key, (3, 4, 7, 7), dtype=jnp.float32)
    mod.training = True
    y_odd = jax.block_until_ready(mod(x_odd, seed=7))
    assert y_odd.shape == x_odd.shape

    print("KERNEL_OK")
</pallas_src>

<mosaic_0001>
module attributes {stable_mosaic.version = 11 : i64} {
  func.func @_drop_path_kernel(%arg0: i32, %arg1: i32, %arg2: memref<2x1xf32, #tpu.memory_space<vmem>>, %arg3: memref<2x1024xf32, #tpu.memory_space<vmem>>, %arg4: memref<2x1024xf32, #tpu.memory_space<vmem>>) attributes {dimension_semantics = [#tpu.dimension_semantics<parallel>, #tpu.dimension_semantics<parallel>], iteration_bounds = array<i64: 1, 1>, scalar_prefetch = 0 : i64, scratch_operands = 0 : i64, tpu.core_type = #tpu.core_type<tc>, window_params = [{transform_indices = @transform_0, window_bounds = array<i64: 2, 1>}, {transform_indices = @transform_1, window_bounds = array<i64: 2, 1024>}, {transform_indices = @transform_2, window_bounds = array<i64: 2, 1024>}]} {
    %c0 = arith.constant 0 : index
    %c0_0 = arith.constant 0 : index
    %0 = vector.load %arg3[%c0, %c0_0] : memref<2x1024xf32, #tpu.memory_space<vmem>>, vector<2x1024xf32>
    %c0_1 = arith.constant 0 : index
    %c0_2 = arith.constant 0 : index
    %1 = vector.load %arg2[%c0_1, %c0_2] : memref<2x1xf32, #tpu.memory_space<vmem>>, vector<2x1xf32>
    %2 = vector.broadcast %1 : vector<2x1xf32> to vector<2x1024xf32>
    %3 = arith.mulf %0, %2 : vector<2x1024xf32>
    %c0_3 = arith.constant 0 : index
    %c0_4 = arith.constant 0 : index
    %4 = vector.load %arg4[%c0_3, %c0_4] : memref<2x1024xf32, #tpu.memory_space<vmem>>, vector<2x1024xf32>
    tpu.vector_store %arg4[%c0_3, %c0_4], %3 {strides = array<i32>} : memref<2x1024xf32, #tpu.memory_space<vmem>>, vector<2x1024xf32>,
    return
  }
  func.func @transform_0(%arg0: i32, %arg1: i32) -> (i32, i32) {
    %c0_i32 = arith.constant 0 : i32
    %c0_i32_0 = arith.constant 0 : i32
    return %arg0, %c0_i32 : i32, i32
  }
  func.func @transform_1(%arg0: i32, %arg1: i32) -> (i32, i32) {
    %c0_i32 = arith.constant 0 : i32
    return %arg0, %arg1 : i32, i32
  }
  func.func @transform_2(%arg0: i32, %arg1: i32) -> (i32, i32) {
    %c0_i32 = arith.constant 0 : i32
    return %arg0, %arg1 : i32, i32
  }
}

</mosaic_0001>

<llo_original>
// kernel: tpu_custom_call.1
$region0: #{tpu_custom_call.1}
  #allocation0 [shape = 'u32[]', space=smem, size = 0x4, offset = 0x4, fixed_abs, tag = 'smem constant byte address 0x4 - core index']
  #allocation1 [shape = 'u32[144,128]{1,0:T(1,128)}', space=vmem, size = 0x12000, scoped, tag = 'internal scratch']
  %s0 = inlined_call_operand.vmem [shape: f32[2,1], index: 0, kind: input, shape index: {}]
  %s1 = inlined_call_operand.hbm [shape: f32[2,1024], index: 1, kind: input, shape index: {}]
  %s2 = inlined_call_operand.hbm [shape: f32[2,1024], index: 2, kind: output, shape index: {}]
  %s3 = sld [smem:[#allocation0]]
  $region22: #{tpu_custom_call.1} parent=0
    _
  %s5 = ssub.s32 1, %s3
  %s6 = scalar_select 0, %s5, %s3
  $region1: #{tpu_custom_call.1} parent=0
    #allocation2 [shape = 'u8[8192]{0}', space=vmem, size = 0x2000, scoped, tag = 'input window, operand 1, single buffered']
    #allocation3 [shape = 's32[1]{0}', space=sflag, size = 0x4, scoped, tag = 'scoped memory for tpu_custom_call.1']
    #allocation4 [shape = 's32[1]{0}', space=sflag, size = 0x4, scoped, tag = 'scoped memory for tpu_custom_call.1']
    #allocation5 [shape = 'u8[8192]{0}', space=vmem, size = 0x2000, scoped, tag = 'output window, operand 0, single buffered']
    %7 = vsyncpa [#allocation3], 0
    %8 = vsyncpa [#allocation4], 0
    // Predicated region
    $region2: #{tpu_custom_call.1} parent=1 // pred_check
      _
    $region3: #{tpu_custom_call.1} parent=1 // pred_check_branch
      %10 = sbr.rel (0) target = $region5
    $region4: #{tpu_custom_call.1} parent=1 // pred_region
      _
    $region5: #{tpu_custom_call.1} parent=1 // pred_fallthru
      _
    // Predicated region
    $region6: #{tpu_custom_call.1} parent=1 // pred_check
      _
    $region7: #{tpu_custom_call.1} parent=1 // pred_check_branch
      %12 = sbr.rel (0) target = $region9
    $region8: #{tpu_custom_call.1} parent=1 // pred_region
      %s14 = ssub.s32 256, 256
      %15 = vsyncadd [#allocation3], %s14
      %s17 = sshll.u32 [#allocation2], 4
      %s18 = int_to_ptr.vmem [resolvable:$true] %s17
      %20 = dma.hbm_to_vmem [thread:$0]  %s1, 256, %s18, [#allocation3]
    $region9: #{tpu_custom_call.1} parent=1 // pred_fallthru
      _
    // Predicated region
    $region10: #{tpu_custom_call.1} parent=1 // pred_check
      _
    $region11: #{tpu_custom_call.1} parent=1 // pred_check_branch
      %22 = sbr.rel (0) target = $region13
    $region12: #{tpu_custom_call.1} parent=1 // pred_region
      %23 = dma.done [#allocation3], 256
    $region13: #{tpu_custom_call.1} parent=1 // pred_fallthru
      _
    %v24 = vld [vmem:[#allocation2] sm:$0xff]
    %v25 = vld [vmem:[#allocation2 + $0x8] sm:$0xff]
    %v26 = vld [vmem:[%s0] sm:$0x3]
    %28 = vset.pattern.permute.xlu0 0
    %29 = vperm.xlu0 %28, %v26
    %v30 = vpop.permute.xlu0 %29
    %v32 = vunpack.c.l.s4 269488144
    %v33 = vunpack.c.0.s8 %v32
    %v34 = vlaneseq
    %v35 = vshrl.u32 %v34, 7
    %v36 = vsub.s32 %v33, %v35
    %v37 = vrot.slane %v30, %v36
    %v39 = vmul.f32 %v24, %v37
    %v40 = vmul.f32 %v25, %v37
    %41 = vst [vmem:[#allocation5] sm:$0xff] %v39
    %42 = vst [vmem:[#allocation5 + $0x8] sm:$0xff] %v40
    // Predicated region
    $region14: #{tpu_custom_call.1} parent=1 // pred_check
      _
    $region15: #{tpu_custom_call.1} parent=1 // pred_check_branch
      %44 = sbr.rel (0) target = $region17
    $region16: #{tpu_custom_call.1} parent=1 // pred_region
      %s46 = ssub.s32 256, 256
      %47 = vsyncadd [#allocation4], %s46
      %s49 = sshll.u32 [#allocation5], 4
      %s50 = int_to_ptr.vmem [resolvable:$true] %s49
      %52 = dma.vmem_to_hbm [thread:$0]  %s50, 256, %s2, [#allocation4]
    $region17: #{tpu_custom_call.1} parent=1 // pred_fallthru
      _
    // Predicated region
    $region18: #{tpu_custom_call.1} parent=1 // pred_check
      _
    $region19: #{tpu_custom_call.1} parent=1 // pred_check_branch
      %54 = sbr.rel (0) target = $region21
    $region20: #{tpu_custom_call.1} parent=1 // pred_region
      %55 = dma.done [#allocation4], 256
    $region21: #{tpu_custom_call.1} parent=1 // pred_fallthru
      _
    %56 = vsyncpa [#allocation3], 1
    %57 = vsyncpa [#allocation4], 1

</llo_original>
